<compile_context>
chip_gen: v7x
topology: tpu7x:2x2x1
jax: 0.10.0
libtpu: 0.0.40
codegen_flags: <defaults>
</compile_context>

<pallas_src>
import functools

import jax
import jax.numpy as jnp
from jax.experimental import pallas as pl
from jax.experimental.pallas import tpu as pltpu

_EPS = 1e-5  # nn.BatchNorm2d default


def _round_up(x, m):
    return (x + m - 1) // m * m


def _pad2d(a, rows, cols):
    return jnp.pad(a, ((0, rows - a.shape[0]), (0, cols - a.shape[1])))


# --------------------------- Pallas kernels ---------------------------


def _matmul_kernel(a_ref, w_ref, o_ref, acc_ref, *, tk):
    """Tiled (tm, tk) @ (tk, N) matmul, f32 accumulation over the k grid axis.

    The full (K_pad, N_pad) weight lives resident in VMEM (constant-index block);
    the k-th (tk, N_pad) slab is sliced in-kernel, so weights are DMA'd from HBM
    once instead of once per row tile.
    """
    k = pl.program_id(1)

    @pl.when(k == 0)
    def _():
        acc_ref[...] = jnp.zeros_like(acc_ref)

    koff = pl.multiple_of(k * tk, tk)
    acc_ref[...] += jnp.dot(
        a_ref[...], w_ref[pl.ds(koff, tk), :], preferred_element_type=jnp.float32
    )

    @pl.when(k == pl.num_programs(1) - 1)
    def _():
        o_ref[...] = acc_ref[...].astype(o_ref.dtype)


def _bn_add_kernel(y_ref, r_ref, sy_ref, ty_ref, sr_ref, tr_ref, o_ref):
    """Fused epilogue: out = y*sy + ty + r*sr + tr (BN-apply + residual add)."""
    o_ref[...] = (
        y_ref[...] * sy_ref[...] + ty_ref[...]
        + r_ref[...] * sr_ref[...] + tr_ref[...]
    )


# --------------------------- Pallas wrappers ---------------------------


def pallas_matmul(a, w, *, tm_max=512):
    """f32 (M, K) @ (K, N) on the MXU, tiled over rows ("parallel") and K ("arbitrary").

    Returns the padded (M_pad, N_pad) result; callers slice out the valid region.
    """
    m, k_dim = a.shape
    kw, n = w.shape
    assert k_dim == kw

    tm = min(tm_max, _round_up(m, 8))
    m_pad = _round_up(m, tm)
    n_pad = _round_up(n, 128)
    k_pad = _round_up(k_dim, 128)
    if k_pad % 512 == 0:
        tk = 512
    elif k_pad % 256 == 0:
        tk = 256
    else:
        tk = 128

    a_p = _pad2d(a.astype(jnp.float32), m_pad, k_pad)
    w_p = _pad2d(w.astype(jnp.float32), k_pad, n_pad)

    kernel = functools.partial(_matmul_kernel, tk=tk)
    return pl.pallas_call(
        kernel,
        out_shape=jax.ShapeDtypeStruct((m_pad, n_pad), jnp.float32),
        grid_spec=pltpu.PrefetchScalarGridSpec(
            num_scalar_prefetch=0,
            grid=(m_pad // tm, k_pad // tk),
            in_specs=[
                pl.BlockSpec((tm, tk), lambda i, k: (i, k)),         # activations
                pl.BlockSpec((k_pad, n_pad), lambda i, k: (0, 0)),   # resident weights
            ],
            out_specs=pl.BlockSpec((tm, n_pad), lambda i, k: (i, 0)),
            scratch_shapes=[pltpu.VMEM((tm, n_pad), jnp.float32)],
        ),
        compiler_params=pltpu.CompilerParams(
            dimension_semantics=("parallel", "arbitrary"),
            vmem_limit_bytes=32 * 1024 * 1024,
        ),
    )(a_p, w_p)


def pallas_bn_add(y, r, sy, ty, sr, tr, *, max_rows_per_tile=1024):
    """Lane-dense fused pass: out = y*sy + ty + r*sr + tr, tiled over rows."""
    rows, c = y.shape
    c_pad = _round_up(c, 128)
    trows = min(max_rows_per_tile, _round_up(rows, 8))
    rows_pad = _round_up(rows, trows)

    def pad_mat(mat):
        return _pad2d(mat.astype(jnp.float32), rows_pad, c_pad)

    def pad_vec(v):
        return jnp.pad(v.astype(jnp.float32), (0, c_pad - c)).reshape(1, c_pad)

    row_spec = pl.BlockSpec((trows, c_pad), lambda i: (i, 0))
    vec_spec = pl.BlockSpec((1, c_pad), lambda i: (0, 0))

    out = pl.pallas_call(
        _bn_add_kernel,
        out_shape=jax.ShapeDtypeStruct((rows_pad, c_pad), jnp.float32),
        grid_spec=pltpu.PrefetchScalarGridSpec(
            num_scalar_prefetch=0,
            grid=(rows_pad // trows,),
            in_specs=[row_spec, row_spec, vec_spec, vec_spec, vec_spec, vec_spec],
            out_specs=row_spec,
        ),
        compiler_params=pltpu.CompilerParams(
            dimension_semantics=("parallel",),
            vmem_limit_bytes=32 * 1024 * 1024,
        ),
    )(pad_mat(y), pad_mat(r), pad_vec(sy), pad_vec(ty), pad_vec(sr), pad_vec(tr))
    return out[:rows, :c]


# ------------------------ forward-pass building blocks ------------------------


def _im2col3x3(x_nhwc, stride):
    """3x3 / pad-1 patch extraction (channels-last) -> (N*Ho*Wo, 9*C)."""
    n, h, w, c = x_nhwc.shape
    xp = jnp.pad(x_nhwc, ((0, 0), (1, 1), (1, 1), (0, 0)))
    ho = (h - 1) // stride + 1
    wo = (w - 1) // stride + 1
    cols = []
    for dy in range(3):
        for dx in range(3):
            cols.append(
                xp[:, dy:dy + (ho - 1) * stride + 1:stride,
                      dx:dx + (wo - 1) * stride + 1:stride, :]
            )
    patches = jnp.concatenate(cols, axis=-1)          # (N, Ho, Wo, 9*C)
    return patches.reshape(n * ho * wo, 9 * c), (ho, wo)


def _batch_bn_scale_shift(y, gamma, beta, eps=_EPS):
    """Training-mode BatchNorm as a per-channel affine y*scale + shift."""
    # TODO(synk): the per-channel batch mean/var reduction and the im2col / avg-pool
    # patch prep are delegated to XLA glue (tiny vs. the Pallas MXU matmuls).
    mean = jnp.mean(y, axis=0)
    var = jnp.var(y, axis=0)                 # biased, matches torch BN train mode
    scale = gamma * jax.lax.rsqrt(var + eps)
    return scale, beta - mean * scale


def resnet_basicblock_forward(x_nchw, params, stride, eps=_EPS):
    """ResNetBasicblock forward (training-mode BN).  NCHW in, NCHW out."""
    x = jnp.transpose(x_nchw.astype(jnp.float32), (0, 2, 3, 1))    # NHWC
    n, h, w, cin = x.shape
    planes = params['wa'].shape[-1]

    # ---- conv_a: ReLU -> conv3x3(stride) -> BN(batch stats) ----
    a_cols, (ho, wo) = _im2col3x3(jax.nn.relu(x), stride)
    rows = n * ho * wo
    pa = pallas_matmul(a_cols, params['wa'].reshape(9 * cin, planes))[:rows, :planes]
    sa, ta = _batch_bn_scale_shift(pa, params['ga'], params['ba'], eps)

    # ---- conv_b: ReLU -> conv3x3(1) -> BN(batch stats) ----
    # BN_a-apply + ReLU are folded into the patch prep (fused by XLA with pad/slice).
    act_a = jax.nn.relu(pa * sa + ta).reshape(n, ho, wo, planes)
    b_cols, _ = _im2col3x3(act_a, 1)
    pb = pallas_matmul(b_cols, params['wb'].reshape(9 * planes, planes))[:rows, :planes]
    sb, tb = _batch_bn_scale_shift(pb, params['gb'], params['bb'], eps)

    # ---- shortcut ----
    ones = jnp.ones((planes,), jnp.float32)
    zeros = jnp.zeros((planes,), jnp.float32)
    if stride == 2:
        # AvgPool2d(2, 2) -> Conv1x1 (no ReLU, no BN).
        assert h % 2 == 0 and w % 2 == 0
        pooled = x.reshape(n, ho, 2, wo, 2, cin).mean(axis=(2, 4))
        r = pallas_matmul(pooled.reshape(rows, cin), params['wd'])[:rows, :planes]
        sr, tr = ones, zeros
    elif cin != planes:
        # ReLUConvBN(cin, planes, 1, 1, 0) shortcut (1x1 conv as a matmul).
        rd = pallas_matmul(jax.nn.relu(x).reshape(n * h * w, cin),
                           params['wd'])[:rows, :planes]
        sr, tr = _batch_bn_scale_shift(rd, params['gd'], params['bd'], eps)
        r = rd
    else:
        # Identity shortcut: no copy kernel — the residual is read directly by the
        # fused BN-apply + add epilogue.
        r, sr, tr = x.reshape(rows, cin), ones, zeros

    # ---- fused epilogue: out = BN_b(pb) + shortcut ----
    out = pallas_bn_add(pb, r, sb, tb, sr, tr).reshape(n, ho, wo, planes)
    return jnp.transpose(out, (0, 3, 1, 2))                        # back to NCHW


# ------------------------------ pure-JAX reference ------------------------------


def _ref_relu_conv_bn(x_nhwc, w_hwio, gamma, beta, stride, padding, eps=_EPS):
    a = jax.nn.relu(x_nhwc)
    y = jax.lax.conv_general_dilated(
        a, w_hwio, window_strides=(stride, stride),
        padding=[(padding, padding), (padding, padding)],
        dimension_numbers=('NHWC', 'HWIO', 'NHWC'),
        precision=jax.lax.Precision.HIGHEST)
    mean = jnp.mean(y, axis=(0, 1, 2))
    var = jnp.var(y, axis=(0, 1, 2))
    return (y - mean) * (gamma * jax.lax.rsqrt(var + eps)) + beta


def _ref_block(x_nchw, params, stride, eps=_EPS):
    x = jnp.transpose(x_nchw.astype(jnp.float32), (0, 2, 3, 1))
    cin = x.shape[-1]
    planes = params['wa'].shape[-1]
    a = _ref_relu_conv_bn(x, params['wa'], params['ga'], params['ba'], stride, 1, eps)
    b = _ref_relu_conv_bn(a, params['wb'], params['gb'], params['bb'], 1, 1, eps)
    if stride == 2:
        n, h, w, _ = x.shape
        pooled = x.reshape(n, h // 2, 2, w // 2, 2, cin).mean(axis=(2, 4))
        r = jnp.einsum('nhwc,cd->nhwd', pooled, params['wd'],
                       precision=jax.lax.Precision.HIGHEST)
    elif cin != planes:
        y = jnp.einsum('nhwc,cd->nhwd', jax.nn.relu(x), params['wd'],
                       precision=jax.lax.Precision.HIGHEST)
        mean = jnp.mean(y, axis=(0, 1, 2))
        var = jnp.var(y, axis=(0, 1, 2))
        r = (y - mean) * (params['gd'] * jax.lax.rsqrt(var + eps)) + params['bd']
    else:
        r = x
    return jnp.transpose(r + b, (0, 3, 1, 2))


def _make_params(key, cin, planes, stride):
    ks = jax.random.split(key, 9)

    def conv_w(k, shape, fan_in):
        return jax.random.normal(k, shape, jnp.float32) / jnp.sqrt(float(fan_in))

    p = {
        'wa': conv_w(ks[0], (3, 3, cin, planes), 9 * cin),      # HWIO
        'ga': 1.0 + 0.1 * jax.random.normal(ks[1], (planes,), jnp.float32),
        'ba': 0.1 * jax.random.normal(ks[2], (planes,), jnp.float32),
        'wb': conv_w(ks[3], (3, 3, planes, planes), 9 * planes),
        'gb': 1.0 + 0.1 * jax.random.normal(ks[4], (planes,), jnp.float32),
        'bb': 0.1 * jax.random.normal(ks[5], (planes,), jnp.float32),
    }
    if stride == 2:
        p['wd'] = conv_w(ks[6], (cin, planes), cin)             # 1x1 conv as matrix
    elif cin != planes:
        p['wd'] = conv_w(ks[6], (cin, planes), cin)
        p['gd'] = 1.0 + 0.1 * jax.random.normal(ks[7], (planes,), jnp.float32)
        p['bd'] = 0.1 * jax.random.normal(ks[8], (planes,), jnp.float32)
    return p


if __name__ == "__main__":
    key = jax.random.PRNGKey(0)
    k_x, k_p = jax.random.split(key)

    # NCHW input, matching the PyTorch module convention.
    n, cin, h, w = 2, 4, 16, 16
    x = jax.random.normal(k_x, (n, cin, h, w), dtype=jnp.float32)

    # Exercise all three shortcut variants of the block.
    configs = [
        dict(planes=4, stride=1),   # identity shortcut
        dict(planes=8, stride=1),   # ReLUConvBN 1x1 shortcut
        dict(planes=8, stride=2),   # AvgPool + Conv1x1 shortcut
    ]
    for cfg in configs:
        params = _make_params(k_p, cin, cfg['planes'], cfg['stride'])
        out = resnet_basicblock_forward(x, params, cfg['stride'])
        out = jax.block_until_ready(out)
        ref = _ref_block(x, params, cfg['stride'])
        assert out.shape == ref.shape, (out.shape, ref.shape, cfg)
        err = float(jnp.max(jnp.abs(out - ref)))
        assert err < 5e-2, f"mismatch {err:.3e} for config {cfg}"
    print("KERNEL_OK")
</pallas_src>

<mosaic_0001>
module attributes {stable_mosaic.version = 11 : i64} {
  func.func @_matmul_kernel(%arg0: i32, %arg1: i32, %arg2: memref<512x128xf32, #tpu.memory_space<vmem>>, %arg3: memref<128x128xf32, #tpu.memory_space<vmem>>, %arg4: memref<512x128xf32, #tpu.memory_space<vmem>>, %arg5: memref<512x128xf32, #tpu.memory_space<vmem>>) attributes {dimension_semantics = [#tpu.dimension_semantics<parallel>, #tpu.dimension_semantics<arbitrary>], iteration_bounds = array<i64: 1, 1>, scalar_prefetch = 0 : i64, scratch_operands = 1 : i64, tpu.core_type = #tpu.core_type<tc>, window_params = [{transform_indices = @transform_0, window_bounds = array<i64: 512, 128>}, {pipeline_mode = #tpu.pipeline_mode<synchronous>, transform_indices = @transform_1, window_bounds = array<i64: 128, 128>}, {transform_indices = @transform_2, window_bounds = array<i64: 512, 128>}]} {
    %c0_i32 = arith.constant 0 : i32
    %0 = arith.cmpi eq, %arg1, %c0_i32 : i32
    %1 = arith.extui %0 : i1 to i32
    %c0_i32_0 = arith.constant 0 : i32
    %2 = arith.cmpi ne, %1, %c0_i32_0 : i32
    scf.if %2 {
      %cst_9 = arith.constant 0.000000e+00 : f32
      %15 = vector.broadcast %cst_9 : f32 to vector<512x128xf32>
      %c0_10 = arith.constant 0 : index
      %c0_11 = arith.constant 0 : index
      %16 = vector.load %arg5[%c0_10, %c0_11] : memref<512x128xf32, #tpu.memory_space<vmem>>, vector<512x128xf32>
      tpu.vector_store %arg5[%c0_10, %c0_11], %15 {strides = array<i32>} : memref<512x128xf32, #tpu.memory_space<vmem>>, vector<512x128xf32>,
    } else {
    }
    %c128_i32 = arith.constant 128 : i32
    %3 = arith.muli %arg1, %c128_i32 : i32
    %4 = tpu.assume_multiple %3, 128 : i32
    %c0 = arith.constant 0 : index
    %c0_1 = arith.constant 0 : index
    %5 = vector.load %arg5[%c0, %c0_1] : memref<512x128xf32, #tpu.memory_space<vmem>>, vector<512x128xf32>
    %c0_2 = arith.constant 0 : index
    %c0_3 = arith.constant 0 : index
    %6 = vector.load %arg2[%c0_2, %c0_3] : memref<512x128xf32, #tpu.memory_space<vmem>>, vector<512x128xf32>
    %7 = arith.index_cast %4 : i32 to index
    %c0_4 = arith.constant 0 : index
    %8 = vector.load %arg3[%7, %c0_4] : memref<128x128xf32, #tpu.memory_space<vmem>>, vector<128x128xf32>
    %cst = arith.constant dense<0.000000e+00> : vector<512x128xf32>
    %9 = tpu.matmul %6, %8, %cst {dimension_numbers = #tpu.dot_dimension_numbers<[1], [0], [0], [1], [0, 0, 1, 1], [], []>} : vector<512x128xf32>, vector<128x128xf32>, vector<512x128xf32> -> vector<512x128xf32>
    %10 = arith.addf %5, %9 : vector<512x128xf32>
    %c0_5 = arith.constant 0 : index
    %c0_6 = arith.constant 0 : index
    %11 = vector.load %arg5[%c0_5, %c0_6] : memref<512x128xf32, #tpu.memory_space<vmem>>, vector<512x128xf32>
    tpu.vector_store %arg5[%c0_5, %c0_6], %10 {strides = array<i32>} : memref<512x128xf32, #tpu.memory_space<vmem>>, vector<512x128xf32>,
    %c0_i32_7 = arith.constant 0 : i32
    %12 = arith.cmpi eq, %arg1, %c0_i32_7 : i32
    %13 = arith.extui %12 : i1 to i32
    %c0_i32_8 = arith.constant 0 : i32
    %14 = arith.cmpi ne, %13, %c0_i32_8 : i32
    scf.if %14 {
      %c0_9 = arith.constant 0 : index
      %c0_10 = arith.constant 0 : index
      %15 = vector.load %arg5[%c0_9, %c0_10] : memref<512x128xf32, #tpu.memory_space<vmem>>, vector<512x128xf32>
      %c0_11 = arith.constant 0 : index
      %c0_12 = arith.constant 0 : index
      %16 = vector.load %arg4[%c0_11, %c0_12] : memref<512x128xf32, #tpu.memory_space<vmem>>, vector<512x128xf32>
      tpu.vector_store %arg4[%c0_11, %c0_12], %15 {strides = array<i32>} : memref<512x128xf32, #tpu.memory_space<vmem>>, vector<512x128xf32>,
    } else {
    }
    return
  }
  func.func @transform_0(%arg0: i32, %arg1: i32) -> (i32, i32) {
    %c0_i32 = arith.constant 0 : i32
    return %arg0, %arg1 : i32, i32
  }
  func.func @transform_1(%arg0: i32, %arg1: i32) -> (i32, i32) {
    %c0_i32 = arith.constant 0 : i32
    %c0_i32_0 = arith.constant 0 : i32
    %c0_i32_1 = arith.constant 0 : i32
    return %c0_i32, %c0_i32_0 : i32, i32
  }
  func.func @transform_2(%arg0: i32, %arg1: i32) -> (i32, i32) {
    %c0_i32 = arith.constant 0 : i32
    %c0_i32_0 = arith.constant 0 : i32
    return %arg0, %c0_i32 : i32, i32
  }
}

</mosaic_0001>

<llo_original>
// kernel: tpu_custom_call.1
$region0: #{tpu_custom_call.1}
  #allocation0 [shape = 'u32[]', space=smem, size = 0x4, offset = 0x4, fixed_abs, tag = 'smem constant byte address 0x4 - core index']
  #allocation1 [shape = 'u32[144,128]{1,0:T(1,128)}', space=vmem, size = 0x12000, scoped, tag = 'internal scratch']
  #allocation2 [shape = 'f32[512,128]{1,0:T(8,128)}', space=vmem, size = 0x40000, scoped, tag = 'scratch operand']
  %s0 = inlined_call_operand.hbm [shape: f32[512,128], index: 0, kind: input, shape index: {}]
  %s1 = inlined_call_operand.hbm [shape: f32[128,128], index: 1, kind: input, shape index: {}]
  %s2 = inlined_call_operand.hbm [shape: f32[512,128], index: 2, kind: output, shape index: {}]
  %s3 = sld [smem:[#allocation0]]
  $region34: #{tpu_custom_call.1} parent=0
    _
  %s5 = ssub.s32 1, %s3
  %s6 = scalar_select 0, %s5, %s3
  $region1: #{tpu_custom_call.1} parent=0
    #allocation3 [shape = 'u8[262144]{0}', space=vmem, size = 0x40000, scoped, tag = 'input window, operand 0, single buffered']
    #allocation4 [shape = 's32[1]{0}', space=sflag, size = 0x4, scoped, tag = 'scoped memory for tpu_custom_call.1']
    #allocation5 [shape = 's32[1]{0}', space=sflag, size = 0x4, scoped, tag = 'scoped memory for tpu_custom_call.1']
    #allocation6 [shape = 'u8[65536]{0}', space=vmem, size = 0x10000, scoped, tag = 'input window, operand 1, single buffered']
    #allocation7 [shape = 's32[1]{0}', space=sflag, size = 0x4, scoped, tag = 'scoped memory for tpu_custom_call.1']
    #allocation8 [shape = 'u8[262144]{0}', space=vmem, size = 0x40000, scoped, tag = 'output window, operand 0, single buffered']
    %7 = vsyncpa [#allocation4], 0
    %8 = vsyncpa [#allocation7], 0
    %9 = vsyncpa [#allocation5], 0
    // Predicated region
    $region2: #{tpu_custom_call.1} parent=1 // pred_check
      _
    $region3: #{tpu_custom_call.1} parent=1 // pred_check_branch
      %11 = sbr.rel (0) target = $region5
    $region4: #{tpu_custom_call.1} parent=1 // pred_region
      %s13 = ssub.s32 8192, 8192
      %14 = vsyncadd [#allocation4], %s13
      %s15 = sshll.u32 [#allocation3], 4
      %s16 = int_to_ptr.vmem [resolvable:$true] %s15
      %21 = dma.hbm_to_vmem [thread:$0]  %s0, 8192, %s16, [#allocation4], 128, 128, 8
    $region5: #{tpu_custom_call.1} parent=1 // pred_fallthru
      _
    // Predicated region
    $region6: #{tpu_custom_call.1} parent=1 // pred_check
      _
    $region7: #{tpu_custom_call.1} parent=1 // pred_check_branch
      %23 = sbr.rel (0) target = $region9
    $region8: #{tpu_custom_call.1} parent=1 // pred_region
      %s25 = ssub.s32 2048, 2048
      %26 = vsyncadd [#allocation7], %s25
      %s27 = sshll.u32 [#allocation6], 4
      %s28 = int_to_ptr.vmem [resolvable:$true] %s27
      %33 = dma.hbm_to_vmem [thread:$0]  %s1, 2048, %s28, [#allocation7], 128, 128, 8
    $region9: #{tpu_custom_call.1} parent=1 // pred_fallthru
      _
    // Predicated region
    $region10: #{tpu_custom_call.1} parent=1 // pred_check
      _
    $region11: #{tpu_custom_call.1} parent=1 // pred_check_branch
      %35 = sbr.rel (0) target = $region13
    $region12: #{tpu_custom_call.1} parent=1 // pred_region
      %36 = dma.done [#allocation4], 8192
    $region13: #{tpu_custom_call.1} parent=1 // pred_fallthru
      _
    // Predicated region
    $region14: #{tpu_custom_call.1} parent=1 // pred_check
      _
    $region15: #{tpu_custom_call.1} parent=1 // pred_check_branch
      %38 = sbr.rel (0) target = $region17
    $region16: #{tpu_custom_call.1} parent=1 // pred_region
      %39 = dma.done [#allocation7], 2048
    $region17: #{tpu_custom_call.1} parent=1 // pred_fallthru
      _
    %p40 = scmp.eq.s32.totalorder 0, 0
    // Predicated region
    $region18: #{tpu_custom_call.1} parent=1 // pred_check
      %p41 = pneg %p40
    $region19: #{tpu_custom_call.1} parent=1 // pred_check_branch
      %43 = sbr.rel (%p41) target = $region21
    $region20: #{tpu_custom_call.1} parent=1 // pred_region
      %44 = vst [vmem:[#allocation2] sm:$0xff] 0.0
      %45 = vst [vmem:[#allocation2 + $0x8] sm:$0xff] 0.0
      %46 = vst [vmem:[#allocation2 + $0x10] sm:$0xff] 0.0
      %47 = vst [vmem:[#allocation2 + $0x18] sm:$0xff] 0.0
      %48 = vst [vmem:[#allocation2 + $0x20] sm:$0xff] 0.0
      %49 = vst [vmem:[#allocation2 + $0x28] sm:$0xff] 0.0
      %50 = vst [vmem:[#allocation2 + $0x30] sm:$0xff] 0.0
      %51 = vst [vmem:[#allocation2 + $0x38] sm:$0xff] 0.0
      %52 = vst [vmem:[#allocation2 + $0x40] sm:$0xff] 0.0
      %53 = vst [vmem:[#allocation2 + $0x48] sm:$0xff] 0.0
      %54 = vst [vmem:[#allocation2 + $0x50] sm:$0xff] 0.0
      %55 = vst [vmem:[#allocation2 + $0x58] sm:$0xff] 0.0
      %56 = vst [vmem:[#allocation2 + $0x60] sm:$0xff] 0.0
      %57 = vst [vmem:[#allocation2 + $0x68] sm:$0xff] 0.0
      %58 = vst [vmem:[#allocation2 + $0x70] sm:$0xff] 0.0
      %59 = vst [vmem:[#allocation2 + $0x78] sm:$0xff] 0.0
      %60 = vst [vmem:[#allocation2 + $0x80] sm:$0xff] 0.0
      %61 = vst [vmem:[#allocation2 + $0x88] sm:$0xff] 0.0
      %62 = vst [vmem:[#allocation2 + $0x90] sm:$0xff] 0.0
      %63 = vst [vmem:[#allocation2 + $0x98] sm:$0xff] 0.0
      %64 = vst [vmem:[#allocation2 + $0xa0] sm:$0xff] 0.0
      %65 = vst [vmem:[#allocation2 + $0xa8] sm:$0xff] 0.0
      %66 = vst [vmem:[#allocation2 + $0xb0] sm:$0xff] 0.0
      %67 = vst [vmem:[#allocation2 + $0xb8] sm:$0xff] 0.0
      %68 = vst [vmem:[#allocation2 + $0xc0] sm:$0xff] 0.0
      %69 = vst [vmem:[#allocation2 + $0xc8] sm:$0xff] 0.0
      %70 = vst [vmem:[#allocation2 + $0xd0] sm:$0xff] 0.0
      %71 = vst [vmem:[#allocation2 + $0xd8] sm:$0xff] 0.0
      %72 = vst [vmem:[#allocation2 + $0xe0] sm:$0xff] 0.0
      %73 = vst [vmem:[#allocation2 + $0xe8] sm:$0xff] 0.0
      %74 = vst [vmem:[#allocation2 + $0xf0] sm:$0xff] 0.0
      %75 = vst [vmem:[#allocation2 + $0xf8] sm:$0xff] 0.0
      %76 = vst [vmem:[#allocation2 + $0x100] sm:$0xff] 0.0
      %77 = vst [vmem:[#allocation2 + $0x108] sm:$0xff] 0.0
      %78 = vst [vmem:[#allocation2 + $0x110] sm:$0xff] 0.0
      %79 = vst [vmem:[#allocation2 + $0x118] sm:$0xff] 0.0
      %80 = vst [vmem:[#allocation2 + $0x120] sm:$0xff] 0.0
      %81 = vst [vmem:[#allocation2 + $0x128] sm:$0xff] 0.0
      %82 = vst [vmem:[#allocation2 + $0x130] sm:$0xff] 0.0
      %83 = vst [vmem:[#allocation2 + $0x138] sm:$0xff] 0.0
      %84 = vst [vmem:[#allocation2 + $0x140] sm:$0xff] 0.0
      %85 = vst [vmem:[#allocation2 + $0x148] sm:$0xff] 0.0
      %86 = vst [vmem:[#allocation2 + $0x150] sm:$0xff] 0.0
      %87 = vst [vmem:[#allocation2 + $0x158] sm:$0xff] 0.0
      %88 = vst [vmem:[#allocation2 + $0x160] sm:$0xff] 0.0
      %89 = vst [vmem:[#allocation2 + $0x168] sm:$0xff] 0.0
      %90 = vst [vmem:[#allocation2 + $0x170] sm:$0xff] 0.0
      %91 = vst [vmem:[#allocation2 + $0x178] sm:$0xff] 0.0
      %92 = vst [vmem:[#allocation2 + $0x180] sm:$0xff] 0.0
      %93 = vst [vmem:[#allocation2 + $0x188] sm:$0xff] 0.0
      %94 = vst [vmem:[#allocation2 + $0x190] sm:$0xff] 0.0
      %95 = vst [vmem:[#allocation2 + $0x198] sm:$0xff] 0.0
      %96 = vst [vmem:[#allocation2 + $0x1a0] sm:$0xff] 0.0
      %97 = vst [vmem:[#allocation2 + $0x1a8] sm:$0xff] 0.0
      %98 = vst [vmem:[#allocation2 + $0x1b0] sm:$0xff] 0.0
      %99 = vst [vmem:[#allocation2 + $0x1b8] sm:$0xff] 0.0
      %100 = vst [vmem:[#allocation2 + $0x1c0] sm:$0xff] 0.0
      %101 = vst [vmem:[#allocation2 + $0x1c8] sm:$0xff] 0.0
      %102 = vst [vmem:[#allocation2 + $0x1d0] sm:$0xff] 0.0
      %103 = vst [vmem:[#allocation2 + $0x1d8] sm:$0xff] 0.0
      %104 = vst [vmem:[#allocation2 + $0x1e0] sm:$0xff] 0.0
      %105 = vst [vmem:[#allocation2 + $0x1e8] sm:$0xff] 0.0
      %106 = vst [vmem:[#allocation2 + $0x1f0] sm:$0xff] 0.0
      %107 = vst [vmem:[#allocation2 + $0x1f8] sm:$0xff] 0.0
    $region21: #{tpu_custom_call.1} parent=1 // pred_fallthru
      _
    %s108 = smul.u32 0, 128
    %v109 = vld [vmem:[#allocation2] sm:$0xff]
    %v110 = vld [vmem:[#allocation2 + $0x8] sm:$0xff]
    %v111 = vld [vmem:[#allocation2 + $0x10] sm:$0xff]
    %v112 = vld [vmem:[#allocation2 + $0x18] sm:$0xff]
    %v113 = vld [vmem:[#allocation2 + $0x20] sm:$0xff]
    %v114 = vld [vmem:[#allocation2 + $0x28] sm:$0xff]
    %v115 = vld [vmem:[#allocation2 + $0x30] sm:$0xff]
    %v116 = vld [vmem:[#allocation2 + $0x38] sm:$0xff]
    %v117 = vld [vmem:[#allocation2 + $0x40] sm:$0xff]
    %v118 = vld [vmem:[#allocation2 + $0x48] sm:$0xff]
    %v119 = vld [vmem:[#allocation2 + $0x50] sm:$0xff]
    %v120 = vld [vmem:[#allocation2 + $0x58] sm:$0xff]
    %v121 = vld [vmem:[#allocation2 + $0x60] sm:$0xff]
    %v122 = vld [vmem:[#allocation2 + $0x68] sm:$0xff]
    %v123 = vld [vmem:[#allocation2 + $0x70] sm:$0xff]
    %v124 = vld [vmem:[#allocation2 + $0x78] sm:$0xff]
    %v125 = vld [vmem:[#allocation2 + $0x80] sm:$0xff]
    %v126 = vld [vmem:[#allocation2 + $0x88] sm:$0xff]
    %v127 = vld [vmem:[#allocation2 + $0x90] sm:$0xff]
    %v128 = vld [vmem:[#allocation2 + $0x98] sm:$0xff]
    %v129 = vld [vmem:[#allocation2 + $0xa0] sm:$0xff]
    %v130 = vld [vmem:[#allocation2 + $0xa8] sm:$0xff]
    %v131 = vld [vmem:[#allocation2 + $0xb0] sm:$0xff]
    %v132 = vld [vmem:[#allocation2 + $0xb8] sm:$0xff]
    %v133 = vld [vmem:[#allocation2 + $0xc0] sm:$0xff]
    %v134 = vld [vmem:[#allocation2 + $0xc8] sm:$0xff]
    %v135 = vld [vmem:[#allocation2 + $0xd0] sm:$0xff]
    %v136 = vld [vmem:[#allocation2 + $0xd8] sm:$0xff]
    %v137 = vld [vmem:[#allocation2 + $0xe0] sm:$0xff]
    %v138 = vld [vmem:[#allocation2 + $0xe8] sm:$0xff]
    %v139 = vld [vmem:[#allocation2 + $0xf0] sm:$0xff]
    %v140 = vld [vmem:[#allocation2 + $0xf8] sm:$0xff]
    %v141 = vld [vmem:[#allocation2 + $0x100] sm:$0xff]
    %v142 = vld [vmem:[#allocation2 + $0x108] sm:$0xff]
    %v143 = vld [vmem:[#allocation2 + $0x110] sm:$0xff]
    %v144 = vld [vmem:[#allocation2 + $0x118] sm:$0xff]
    %v145 = vld [vmem:[#allocation2 + $0x120] sm:$0xff]
    %v146 = vld [vmem:[#allocation2 + $0x128] sm:$0xff]
    %v147 = vld [vmem:[#allocation2 + $0x130] sm:$0xff]
    %v148 = vld [vmem:[#allocation2 + $0x138] sm:$0xff]
    %v149 = vld [vmem:[#allocation2 + $0x140] sm:$0xff]
    %v150 = vld [vmem:[#allocation2 + $0x148] sm:$0xff]
    %v151 = vld [vmem:[#allocation2 + $0x150] sm:$0xff]
    %v152 = vld [vmem:[#allocation2 + $0x158] sm:$0xff]
    %v153 = vld [vmem:[#allocation2 + $0x160] sm:$0xff]
    %v154 = vld [vmem:[#allocation2 + $0x168] sm:$0xff]
    %v155 = vld [vmem:[#allocation2 + $0x170] sm:$0xff]
    %v156 = vld [vmem:[#allocation2 + $0x178] sm:$0xff]
    %v157 = vld [vmem:[#allocation2 + $0x180] sm:$0xff]
    %v158 = vld [vmem:[#allocation2 + $0x188] sm:$0xff]
    %v159 = vld [vmem:[#allocation2 + $0x190] sm:$0xff]
    %v160 = vld [vmem:[#allocation2 + $0x198] sm:$0xff]
    %v161 = vld [vmem:[#allocation2 + $0x1a0] sm:$0xff]
    %v162 = vld [vmem:[#allocation2 + $0x1a8] sm:$0xff]
    %v163 = vld [vmem:[#allocation2 + $0x1b0] sm:$0xff]
    %v164 = vld [vmem:[#allocation2 + $0x1b8] sm:$0xff]
    %v165 = vld [vmem:[#allocation2 + $0x1c0] sm:$0xff]
    %v166 = vld [vmem:[#allocation2 + $0x1c8] sm:$0xff]
    %v167 = vld [vmem:[#allocation2 + $0x1d0] sm:$0xff]
    %v168 = vld [vmem:[#allocation2 + $0x1d8] sm:$0xff]
    %v169 = vld [vmem:[#allocation2 + $0x1e0] sm:$0xff]
    %v170 = vld [vmem:[#allocation2 + $0x1e8] sm:$0xff]
    %v171 = vld [vmem:[#allocation2 + $0x1f0] sm:$0xff]
    %v172 = vld [vmem:[#allocation2 + $0x1f8] sm:$0xff]
    %v173 = vld [vmem:[#allocation3] sm:$0xff]
    %v174 = vld [vmem:[#allocation3 + $0x8] sm:$0xff]
    %v175 = vld [vmem:[#allocation3 + $0x10] sm:$0xff]
    %v176 = vld [vmem:[#allocation3 + $0x18] sm:$0xff]
    %v177 = vld [vmem:[#allocation3 + $0x20] sm:$0xff]
    %v178 = vld [vmem:[#allocation3 + $0x28] sm:$0xff]
    %v179 = vld [vmem:[#allocation3 + $0x30] sm:$0xff]
    %v180 = vld [vmem:[#allocation3 + $0x38] sm:$0xff]
    %v181 = vld [vmem:[#allocation3 + $0x40] sm:$0xff]
    %v182 = vld [vmem:[#allocation3 + $0x48] sm:$0xff]
    %v183 = vld [vmem:[#allocation3 + $0x50] sm:$0xff]
    %v184 = vld [vmem:[#allocation3 + $0x58] sm:$0xff]
    %v185 = vld [vmem:[#allocation3 + $0x60] sm:$0xff]
    %v186 = vld [vmem:[#allocation3 + $0x68] sm:$0xff]
    %v187 = vld [vmem:[#allocation3 + $0x70] sm:$0xff]
    %v188 = vld [vmem:[#allocation3 + $0x78] sm:$0xff]
    %v189 = vld [vmem:[#allocation3 + $0x80] sm:$0xff]
    %v190 = vld [vmem:[#allocation3 + $0x88] sm:$0xff]
    %v191 = vld [vmem:[#allocation3 + $0x90] sm:$0xff]
    %v192 = vld [vmem:[#allocation3 + $0x98] sm:$0xff]
    %v193 = vld [vmem:[#allocation3 + $0xa0] sm:$0xff]
    %v194 = vld [vmem:[#allocation3 + $0xa8] sm:$0xff]
    %v195 = vld [vmem:[#allocation3 + $0xb0] sm:$0xff]
    %v196 = vld [vmem:[#allocation3 + $0xb8] sm:$0xff]
    %v197 = vld [vmem:[#allocation3 + $0xc0] sm:$0xff]
    %v198 = vld [vmem:[#allocation3 + $0xc8] sm:$0xff]
    %v199 = vld [vmem:[#allocation3 + $0xd0] sm:$0xff]
    %v200 = vld [vmem:[#allocation3 + $0xd8] sm:$0xff]
    %v201 = vld [vmem:[#allocation3 + $0xe0] sm:$0xff]
    %v202 = vld [vmem:[#allocation3 + $0xe8] sm:$0xff]
    %v203 = vld [vmem:[#allocation3 + $0xf0] sm:$0xff]
    %v204 = vld [vmem:[#allocation3 + $0xf8] sm:$0xff]
    %v205 = vld [vmem:[#allocation3 + $0x100] sm:$0xff]
    %v206 = vld [vmem:[#allocation3 + $0x108] sm:$0xff]
    %v207 = vld [vmem:[#allocation3 + $0x110] sm:$0xff]
    %v208 = vld [vmem:[#allocation3 + $0x118] sm:$0xff]
    %v209 = vld [vmem:[#allocation3 + $0x120] sm:$0xff]
    %v210 = vld [vmem:[#allocation3 + $0x128] sm:$0xff]
    %v211 = vld [vmem:[#allocation3 + $0x130] sm:$0xff]
    %v212 = vld [vmem:[#allocation3 + $0x138] sm:$0xff]
    %v213 = vld [vmem:[#allocation3 + $0x140] sm:$0xff]
    %v214 = vld [vmem:[#allocation3 + $0x148] sm:$0xff]
    %v215 = vld [vmem:[#allocation3 + $0x150] sm:$0xff]
    %v216 = vld [vmem:[#allocation3 + $0x158] sm:$0xff]
    %v217 = vld [vmem:[#allocation3 + $0x160] sm:$0xff]
    %v218 = vld [vmem:[#allocation3 + $0x168] sm:$0xff]
    %v219 = vld [vmem:[#allocation3 + $0x170] sm:$0xff]
    %v220 = vld [vmem:[#allocation3 + $0x178] sm:$0xff]
    %v221 = vld [vmem:[#allocation3 + $0x180] sm:$0xff]
    %v222 = vld [vmem:[#allocation3 + $0x188] sm:$0xff]
    %v223 = vld [vmem:[#allocation3 + $0x190] sm:$0xff]
    %v224 = vld [vmem:[#allocation3 + $0x198] sm:$0xff]
    %v225 = vld [vmem:[#allocation3 + $0x1a0] sm:$0xff]
    %v226 = vld [vmem:[#allocation3 + $0x1a8] sm:$0xff]
    %v227 = vld [vmem:[#allocation3 + $0x1b0] sm:$0xff]
    %v228 = vld [vmem:[#allocation3 + $0x1b8] sm:$0xff]
    %v229 = vld [vmem:[#allocation3 + $0x1c0] sm:$0xff]
    %v230 = vld [vmem:[#allocation3 + $0x1c8] sm:$0xff]
    %v231 = vld [vmem:[#allocation3 + $0x1d0] sm:$0xff]
    %v232 = vld [vmem:[#allocation3 + $0x1d8] sm:$0xff]
    %v233 = vld [vmem:[#allocation3 + $0x1e0] sm:$0xff]
    %v234 = vld [vmem:[#allocation3 + $0x1e8] sm:$0xff]
    %v235 = vld [vmem:[#allocation3 + $0x1f0] sm:$0xff]
    %v236 = vld [vmem:[#allocation3 + $0x1f8] sm:$0xff]
    %s237 = scalar_lea.vmem [#allocation6], %s108
    %v238 = vld [vmem:[%s237] sm:$0xff]
    %v239 = vld [vmem:[%s237 + $0x8] sm:$0xff]
    %v240 = vld [vmem:[%s237 + $0x10] sm:$0xff]
    %v241 = vld [vmem:[%s237 + $0x18] sm:$0xff]
    %v242 = vld [vmem:[%s237 + $0x20] sm:$0xff]
    %v243 = vld [vmem:[%s237 + $0x28] sm:$0xff]
    %v244 = vld [vmem:[%s237 + $0x30] sm:$0xff]
    %v245 = vld [vmem:[%s237 + $0x38] sm:$0xff]
    %v246 = vld [vmem:[%s237 + $0x40] sm:$0xff]
    %v247 = vld [vmem:[%s237 + $0x48] sm:$0xff]
    %v248 = vld [vmem:[%s237 + $0x50] sm:$0xff]
    %v249 = vld [vmem:[%s237 + $0x58] sm:$0xff]
    %v250 = vld [vmem:[%s237 + $0x60] sm:$0xff]
    %v251 = vld [vmem:[%s237 + $0x68] sm:$0xff]
    %v252 = vld [vmem:[%s237 + $0x70] sm:$0xff]
    %v253 = vld [vmem:[%s237 + $0x78] sm:$0xff]
    %254 = vmatprep.subr.mxu0 0.0
    %255 = vmatpush1.msra.mxu0 %v238
    %256 = vmatprep.subr.mxu0 0.0
    %257 = vmatpush1.msra.mxu0 %v239
    %258 = vmatprep.subr.mxu0 0.0
    %259 = vmatpush1.msra.mxu0 %v240
    %260 = vmatprep.subr.mxu0 0.0
    %261 = vmatpush1.msra.mxu0 %v241
    %262 = vmatprep.subr.mxu0 0.0
    %263 = vmatpush1.msra.mxu0 %v242
    %264 = vmatprep.subr.mxu0 0.0
    %265 = vmatpush1.msra.mxu0 %v243
    %266 = vmatprep.subr.mxu0 0.0
    %267 = vmatpush1.msra.mxu0 %v244
    %268 = vmatprep.subr.mxu0 0.0
    %269 = vmatpush1.msra.mxu0 %v245
    %270 = vmatprep.subr.mxu0 0.0
    %271 = vmatpush1.msra.mxu0 %v246
    %272 = vmatprep.subr.mxu0 0.0
    %273 = vmatpush1.msra.mxu0 %v247
    %274 = vmatprep.subr.mxu0 0.0
    %275 = vmatpush1.msra.mxu0 %v248
    %276 = vmatprep.subr.mxu0 0.0
    %277 = vmatpush1.msra.mxu0 %v249
    %278 = vmatprep.subr.mxu0 0.0
    %279 = vmatpush1.msra.mxu0 %v250
    %280 = vmatprep.subr.mxu0 0.0
    %281 = vmatpush1.msra.mxu0 %v251
    %282 = vmatprep.subr.mxu0 0.0
    %283 = vmatpush1.msra.mxu0 %v252
    %284 = vmatprep.subr.mxu0 0.0
    %285 = vmatpush1.msra.mxu0 %v253
    %286 = vmatprep.subr.mxu0 0.0
    %287 = vmatpush1.msra.mxu0 0.0
    %288 = vmatprep.subr.mxu0 0.0
    %289 = vmatpush1.msra.mxu0 0.0
    %290 = vmatprep.subr.mxu0 0.0
    %291 = vmatpush1.msra.mxu0 0.0
    %292 = vmatprep.subr.mxu0 0.0
    %293 = vmatpush1.msra.mxu0 0.0
    %294 = vmatprep.subr.mxu0 0.0
    %295 = vmatpush1.msra.mxu0 0.0
    %296 = vmatprep.subr.mxu0 0.0
    %297 = vmatpush1.msra.mxu0 0.0
    %298 = vmatprep.subr.mxu0 0.0
    %299 = vmatpush1.msra.mxu0 0.0
    %300 = vmatprep.subr.mxu0 0.0
    %301 = vmatpush1.msra.mxu0 0.0
    %302 = vmatprep.subr.mxu0 0.0
    %303 = vmatpush1.msra.mxu0 0.0
    %304 = vmatprep.subr.mxu0 0.0
    %305 = vmatpush1.msra.mxu0 0.0
    %306 = vmatprep.subr.mxu0 0.0
    %307 = vmatpush1.msra.mxu0 0.0
    %308 = vmatprep.subr.mxu0 0.0
    %309 = vmatpush1.msra.mxu0 0.0
    %310 = vmatprep.subr.mxu0 0.0
    %311 = vmatpush1.msra.mxu0 0.0
    %312 = vmatprep.subr.mxu0 0.0
    %313 = vmatpush1.msra.mxu0 0.0
    %314 = vmatprep.subr.mxu0 0.0
    %315 = vmatpush1.msra.mxu0 0.0
    %316 = vmatprep.subr.mxu0 0.0
    %317 = vmatpush1.msra.mxu0 0.0
    %318 = vmatprep.mubr.f32.mxu0 0.0
    %319 = vmatmul.mubr.f32.gmra.mrb[0].mxu0 %v173
    %v320 = vpop.f32.mrb[0].mxu0
    %v321 = vadd.f32 0.0, %v320
    %v322 = vpop.f32.mrb[0].mxu0
    %323 = vmatprep.mubr.f32.mxu0 0.0
    %324 = vmatmul.mubr.f32.gmra.mrb[0].mxu0 %v174
    %v325 = vpop.f32.mrb[0].mxu0
    %v326 = vadd.f32 0.0, %v325
    %v327 = vpop.f32.mrb[0].mxu0
    %328 = vmatprep.mubr.f32.mxu0 0.0
    %329 = vmatmul.mubr.f32.gmra.mrb[0].mxu0 %v175
    %v330 = vpop.f32.mrb[0].mxu0
    %v331 = vadd.f32 0.0, %v330
    %v332 = vpop.f32.mrb[0].mxu0
    %333 = vmatprep.mubr.f32.mxu0 0.0
    %334 = vmatmul.mubr.f32.gmra.mrb[0].mxu0 %v176
    %v335 = vpop.f32.mrb[0].mxu0
    %v336 = vadd.f32 0.0, %v335
    %v337 = vpop.f32.mrb[0].mxu0
    %338 = vmatprep.mubr.f32.mxu0 0.0
    %339 = vmatmul.mubr.f32.gmra.mrb[0].mxu0 %v177
    %v340 = vpop.f32.mrb[0].mxu0
    %v341 = vadd.f32 0.0, %v340
    %v342 = vpop.f32.mrb[0].mxu0
    %343 = vmatprep.mubr.f32.mxu0 0.0
    %344 = vmatmul.mubr.f32.gmra.mrb[0].mxu0 %v178
    %v345 = vpop.f32.mrb[0].mxu0
    %v346 = vadd.f32 0.0, %v345
    %v347 = vpop.f32.mrb[0].mxu0
    %348 = vmatprep.mubr.f32.mxu0 0.0
    %349 = vmatmul.mubr.f32.gmra.mrb[0].mxu0 %v179
    %v350 = vpop.f32.mrb[0].mxu0
    %v351 = vadd.f32 0.0, %v350
    %v352 = vpop.f32.mrb[0].mxu0
    %353 = vmatprep.mubr.f32.mxu0 0.0
    %354 = vmatmul.mubr.f32.gmra.mrb[0].mxu0 %v180
    %v355 = vpop.f32.mrb[0].mxu0
    %v356 = vadd.f32 0.0, %v355
    %v357 = vpop.f32.mrb[0].mxu0
    %358 = vmatprep.mubr.f32.mxu0 0.0
    %359 = vmatmul.mubr.f32.gmra.mrb[0].mxu0 %v181
    %v360 = vpop.f32.mrb[0].mxu0
    %v361 = vadd.f32 0.0, %v360
    %v362 = vpop.f32.mrb[0].mxu0
    %363 = vmatprep.mubr.f32.mxu0 0.0
    %364 = vmatmul.mubr.f32.gmra.mrb[0].mxu0 %v182
    %v365 = vpop.f32.mrb[0].mxu0
    %v366 = vadd.f32 0.0, %v365
    %v367 = vpop.f32.mrb[0].mxu0
    %368 = vmatprep.mubr.f32.mxu0 0.0
    %369 = vmatmul.mubr.f32.gmra.mrb[0].mxu0 %v183
    %v370 = vpop.f32.mrb[0].mxu0
    %v371 = vadd.f32 0.0, %v370
    %v372 = vpop.f32.mrb[0].mxu0
    %373 = vmatprep.mubr.f32.mxu0 0.0
    %374 = vmatmul.mubr.f32.gmra.mrb[0].mxu0 %v184
    %v375 = vpop.f32.mrb[0].mxu0
    %v376 = vadd.f32 0.0, %v375
    %v377 = vpop.f32.mrb[0].mxu0
    %378 = vmatprep.mubr.f32.mxu0 0.0
    %379 = vmatmul.mubr.f32.gmra.mrb[0].mxu0 %v185
    %v380 = vpop.f32.mrb[0].mxu0
    %v381 = vadd.f32 0.0, %v380
    %v382 = vpop.f32.mrb[0].mxu0
    %383 = vmatprep.mubr.f32.mxu0 0.0
    %384 = vmatmul.mubr.f32.gmra.mrb[0].mxu0 %v186
    %v385 = vpop.f32.mrb[0].mxu0
    %v386 = vadd.f32 0.0, %v385
    %v387 = vpop.f32.mrb[0].mxu0
    %388 = vmatprep.mubr.f32.mxu0 0.0
    %389 = vmatmul.mubr.f32.gmra.mrb[0].mxu0 %v187
    %v390 = vpop.f32.mrb[0].mxu0
    %v391 = vadd.f32 0.0, %v390
    %v392 = vpop.f32.mrb[0].mxu0
    %393 = vmatprep.mubr.f32.mxu0 0.0
    %394 = vmatmul.mubr.f32.gmra.mrb[0].mxu0 %v188
    %v395 = vpop.f32.mrb[0].mxu0
    %v396 = vadd.f32 0.0, %v395
    %v397 = vpop.f32.mrb[0].mxu0
    %398 = vmatprep.mubr.f32.mxu0 0.0
    %399 = vmatmul.mubr.f32.gmra.mrb[0].mxu0 %v189
    %v400 = vpop.f32.mrb[0].mxu0
    %v401 = vadd.f32 0.0, %v400
    %v402 = vpop.f32.mrb[0].mxu0
    %403 = vmatprep.mubr.f32.mxu0 0.0
    %404 = vmatmul.mubr.f32.gmra.mrb[0].mxu0 %v190
    %v405 = vpop.f32.mrb[0].mxu0
    %v406 = vadd.f32 0.0, %v405
    %v407 = vpop.f32.mrb[0].mxu0
    %408 = vmatprep.mubr.f32.mxu0 0.0
    %409 = vmatmul.mubr.f32.gmra.mrb[0].mxu0 %v191
    %v410 = vpop.f32.mrb[0].mxu0
    %v411 = vadd.f32 0.0, %v410
    %v412 = vpop.f32.mrb[0].mxu0
    %413 = vmatprep.mubr.f32.mxu0 0.0
    %414 = vmatmul.mubr.f32.gmra.mrb[0].mxu0 %v192
    %v415 = vpop.f32.mrb[0].mxu0
    %v416 = vadd.f32 0.0, %v415
    %v417 = vpop.f32.mrb[0].mxu0
    %418 = vmatprep.mubr.f32.mxu0 0.0
    %419 = vmatmul.mubr.f32.gmra.mrb[0].mxu0 %v193
    %v420 = vpop.f32.mrb[0].mxu0
    %v421 = vadd.f32 0.0, %v420
    %v422 = vpop.f32.mrb[0].mxu0
    %423 = vmatprep.mubr.f32.mxu0 0.0
    %424 = vmatmul.mubr.f32.gmra.mrb[0].mxu0 %v194
    %v425 = vpop.f32.mrb[0].mxu0
    %v426 = vadd.f32 0.0, %v425
    %v427 = vpop.f32.mrb[0].mxu0
    %428 = vmatprep.mubr.f32.mxu0 0.0
    %429 = vmatmul.mubr.f32.gmra.mrb[0].mxu0 %v195
    %v430 = vpop.f32.mrb[0].mxu0
    %v431 = vadd.f32 0.0, %v430
    %v432 = vpop.f32.mrb[0].mxu0
    %433 = vmatprep.mubr.f32.mxu0 0.0
    %434 = vmatmul.mubr.f32.gmra.mrb[0].mxu0 %v196
    %v435 = vpop.f32.mrb[0].mxu0
    %v436 = vadd.f32 0.0, %v435
    %v437 = vpop.f32.mrb[0].mxu0
    %438 = vmatprep.mubr.f32.mxu0 0.0
    %439 = vmatmul.mubr.f32.gmra.mrb[0].mxu0 %v197
    %v440 = vpop.f32.mrb[0].mxu0
    %v441 = vadd.f32 0.0, %v440
    %v442 = vpop.f32.mrb[0].mxu0
    %443 = vmatprep.mubr.f32.mxu0 0.0
    %444 = vmatmul.mubr.f32.gmra.mrb[0].mxu0 %v198
    %v445 = vpop.f32.mrb[0].mxu0
    %v446 = vadd.f32 0.0, %v445
    %v447 = vpop.f32.mrb[0].mxu0
    %448 = vmatprep.mubr.f32.mxu0 0.0
    %449 = vmatmul.mubr.f32.gmra.mrb[0].mxu0 %v199
    %v450 = vpop.f32.mrb[0].mxu0
    %v451 = vadd.f32 0.0, %v450
    %v452 = vpop.f32.mrb[0].mxu0
    %453 = vmatprep.mubr.f32.mxu0 0.0
    %454 = vmatmul.mubr.f32.gmra.mrb[0].mxu0 %v200
    %v455 = vpop.f32.mrb[0].mxu0
    %v456 = vadd.f32 0.0, %v455
    %v457 = vpop.f32.mrb[0].mxu0
    %458 = vmatprep.mubr.f32.mxu0 0.0
    %459 = vmatmul.mubr.f32.gmra.mrb[0].mxu0 %v201
    %v460 = vpop.f32.mrb[0].mxu0
    %v461 = vadd.f32 0.0, %v460
    %v462 = vpop.f32.mrb[0].mxu0
    %463 = vmatprep.mubr.f32.mxu0 0.0
    %464 = vmatmul.mubr.f32.gmra.mrb[0].mxu0 %v202
    %v465 = vpop.f32.mrb[0].mxu0
    %v466 = vadd.f32 0.0, %v465
    %v467 = vpop.f32.mrb[0].mxu0
    %468 = vmatprep.mubr.f32.mxu0 0.0
    %469 = vmatmul.mubr.f32.gmra.mrb[0].mxu0 %v203
    %v470 = vpop.f32.mrb[0].mxu0
    %v471 = vadd.f32 0.0, %v470
    %v472 = vpop.f32.mrb[0].mxu0
    %473 = vmatprep.mubr.f32.mxu0 0.0
    %474 = vmatmul.mubr.f32.gmra.mrb[0].mxu0 %v204
    %v475 = vpop.f32.mrb[0].mxu0
    %v476 = vadd.f32 0.0, %v475
    %v477 = vpop.f32.mrb[0].mxu0
    %478 = vmatprep.mubr.f32.mxu0 0.0
    %479 = vmatmul.mubr.f32.gmra.mrb[0].mxu0 %v205
    %v480 = vpop.f32.mrb[0].mxu0
    %v481 = vadd.f32 0.0, %v480
    %v482 = vpop.f32.mrb[0].mxu0
    %483 = vmatprep.mubr.f32.mxu0 0.0
    %484 = vmatmul.mubr.f32.gmra.mrb[0].mxu0 %v206
    %v485 = vpop.f32.mrb[0].mxu0
    %v486 = vadd.f32 0.0, %v485
    %v487 = vpop.f32.mrb[0].mxu0
    %488 = vmatprep.mubr.f32.mxu0 0.0
    %489 = vmatmul.mubr.f32.gmra.mrb[0].mxu0 %v207
    %v490 = vpop.f32.mrb[0].mxu0
    %v491 = vadd.f32 0.0, %v490
    %v492 = vpop.f32.mrb[0].mxu0
    %493 = vmatprep.mubr.f32.mxu0 0.0
    %494 = vmatmul.mubr.f32.gmra.mrb[0].mxu0 %v208
    %v495 = vpop.f32.mrb[0].mxu0
    %v496 = vadd.f32 0.0, %v495
    %v497 = vpop.f32.mrb[0].mxu0
    %498 = vmatprep.mubr.f32.mxu0 0.0
    %499 = vmatmul.mubr.f32.gmra.mrb[0].mxu0 %v209
    %v500 = vpop.f32.mrb[0].mxu0
    %v501 = vadd.f32 0.0, %v500
    %v502 = vpop.f32.mrb[0].mxu0
    %503 = vmatprep.mubr.f32.mxu0 0.0
    %504 = vmatmul.mubr.f32.gmra.mrb[0].mxu0 %v210
    %v505 = vpop.f32.mrb[0].mxu0
    %v506 = vadd.f32 0.0, %v505
    %v507 = vpop.f32.mrb[0].mxu0
    %508 = vmatprep.mubr.f32.mxu0 0.0
    %509 = vmatmul.mubr.f32.gmra.mrb[0].mxu0 %v211
    %v510 = vpop.f32.mrb[0].mxu0
    %v511 = vadd.f32 0.0, %v510
    %v512 = vpop.f32.mrb[0].mxu0
    %513 = vmatprep.mubr.f32.mxu0 0.0
    %514 = vmatmul.mubr.f32.gmra.mrb[0].mxu0 %v212
    %v515 = vpop.f32.mrb[0].mxu0
    %v516 = vadd.f32 0.0, %v515
    %v517 = vpop.f32.mrb[0].mxu0
    %518 = vmatprep.mubr.f32.mxu0 0.0
    %519 = vmatmul.mubr.f32.gmra.mrb[0].mxu0 %v213
    %v520 = vpop.f32.mrb[0].mxu0
    %v521 = vadd.f32 0.0, %v520
    %v522 = vpop.f32.mrb[0].mxu0
    %523 = vmatprep.mubr.f32.mxu0 0.0
    %524 = vmatmul.mubr.f32.gmra.mrb[0].mxu0 %v214
    %v525 = vpop.f32.mrb[0].mxu0
    %v526 = vadd.f32 0.0, %v525
    %v527 = vpop.f32.mrb[0].mxu0
    %528 = vmatprep.mubr.f32.mxu0 0.0
    %529 = vmatmul.mubr.f32.gmra.mrb[0].mxu0 %v215
    %v530 = vpop.f32.mrb[0].mxu0
    %v531 = vadd.f32 0.0, %v530
    %v532 = vpop.f32.mrb[0].mxu0
    %533 = vmatprep.mubr.f32.mxu0 0.0
    %534 = vmatmul.mubr.f32.gmra.mrb[0].mxu0 %v216
    %v535 = vpop.f32.mrb[0].mxu0
    %v536 = vadd.f32 0.0, %v535
    %v537 = vpop.f32.mrb[0].mxu0
    %538 = vmatprep.mubr.f32.mxu0 0.0
    %539 = vmatmul.mubr.f32.gmra.mrb[0].mxu0 %v217
    %v540 = vpop.f32.mrb[0].mxu0
    %v541 = vadd.f32 0.0, %v540
    %v542 = vpop.f32.mrb[0].mxu0
    %543 = vmatprep.mubr.f32.mxu0 0.0
    %544 = vmatmul.mubr.f32.gmra.mrb[0].mxu0 %v218
    %v545 = vpop.f32.mrb[0].mxu0
    %v546 = vadd.f32 0.0, %v545
    %v547 = vpop.f32.mrb[0].mxu0
    %548 = vmatprep.mubr.f32.mxu0 0.0
    %549 = vmatmul.mubr.f32.gmra.mrb[0].mxu0 %v219
    %v550 = vpop.f32.mrb[0].mxu0
    %v551 = vadd.f32 0.0, %v550
    %v552 = vpop.f32.mrb[0].mxu0
    %553 = vmatprep.mubr.f32.mxu0 0.0
    %554 = vmatmul.mubr.f32.gmra.mrb[0].mxu0 %v220
    %v555 = vpop.f32.mrb[0].mxu0
    %v556 = vadd.f32 0.0, %v555
    %v557 = vpop.f32.mrb[0].mxu0
    %558 = vmatprep.mubr.f32.mxu0 0.0
    %559 = vmatmul.mubr.f32.gmra.mrb[0].mxu0 %v221
    %v560 = vpop.f32.mrb[0].mxu0
    %v561 = vadd.f32 0.0, %v560
    %v562 = vpop.f32.mrb[0].mxu0
    %563 = vmatprep.mubr.f32.mxu0 0.0
    %564 = vmatmul.mubr.f32.gmra.mrb[0].mxu0 %v222
    %v565 = vpop.f32.mrb[0].mxu0
    %v566 = vadd.f32 0.0, %v565
    %v567 = vpop.f32.mrb[0].mxu0
    %568 = vmatprep.mubr.f32.mxu0 0.0
    %569 = vmatmul.mubr.f32.gmra.mrb[0].mxu0 %v223
    %v570 = vpop.f32.mrb[0].mxu0
    %v571 = vadd.f32 0.0, %v570
    %v572 = vpop.f32.mrb[0].mxu0
    %573 = vmatprep.mubr.f32.mxu0 0.0
    %574 = vmatmul.mubr.f32.gmra.mrb[0].mxu0 %v224
    %v575 = vpop.f32.mrb[0].mxu0
    %v576 = vadd.f32 0.0, %v575
    %v577 = vpop.f32.mrb[0].mxu0
    %578 = vmatprep.mubr.f32.mxu0 0.0
    %579 = vmatmul.mubr.f32.gmra.mrb[0].mxu0 %v225
    %v580 = vpop.f32.mrb[0].mxu0
    %v581 = vadd.f32 0.0, %v580
    %v582 = vpop.f32.mrb[0].mxu0
    %583 = vmatprep.mubr.f32.mxu0 0.0
    %584 = vmatmul.mubr.f32.gmra.mrb[0].mxu0 %v226
    %v585 = vpop.f32.mrb[0].mxu0
    %v586 = vadd.f32 0.0, %v585
    %v587 = vpop.f32.mrb[0].mxu0
    %588 = vmatprep.mubr.f32.mxu0 0.0
    %589 = vmatmul.mubr.f32.gmra.mrb[0].mxu0 %v227
    %v590 = vpop.f32.mrb[0].mxu0
    %v591 = vadd.f32 0.0, %v590
    %v592 = vpop.f32.mrb[0].mxu0
    %593 = vmatprep.mubr.f32.mxu0 0.0
    %594 = vmatmul.mubr.f32.gmra.mrb[0].mxu0 %v228
    %v595 = vpop.f32.mrb[0].mxu0
    %v596 = vadd.f32 0.0, %v595
    %v597 = vpop.f32.mrb[0].mxu0
    %598 = vmatprep.mubr.f32.mxu0 0.0
    %599 = vmatmul.mubr.f32.gmra.mrb[0].mxu0 %v229
    %v600 = vpop.f32.mrb[0].mxu0
    %v601 = vadd.f32 0.0, %v600
    %v602 = vpop.f32.mrb[0].mxu0
    %603 = vmatprep.mubr.f32.mxu0 0.0
    %604 = vmatmul.mubr.f32.gmra.mrb[0].mxu0 %v230
    %v605 = vpop.f32.mrb[0].mxu0
    %v606 = vadd.f32 0.0, %v605
    %v607 = vpop.f32.mrb[0].mxu0
    %608 = vmatprep.mubr.f32.mxu0 0.0
    %609 = vmatmul.mubr.f32.gmra.mrb[0].mxu0 %v231
    %v610 = vpop.f32.mrb[0].mxu0
    %v611 = vadd.f32 0.0, %v610
    %v612 = vpop.f32.mrb[0].mxu0
    %613 = vmatprep.mubr.f32.mxu0 0.0
    %614 = vmatmul.mubr.f32.gmra.mrb[0].mxu0 %v232
    %v615 = vpop.f32.mrb[0].mxu0
    %v616 = vadd.f32 0.0, %v615
    %v617 = vpop.f32.mrb[0].mxu0
    %618 = vmatprep.mubr.f32.mxu0 0.0
    %619 = vmatmul.mubr.f32.gmra.mrb[0].mxu0 %v233
    %v620 = vpop.f32.mrb[0].mxu0
    %v621 = vadd.f32 0.0, %v620
    %v622 = vpop.f32.mrb[0].mxu0
    %623 = vmatprep.mubr.f32.mxu0 0.0
    %624 = vmatmul.mubr.f32.gmra.mrb[0].mxu0 %v234
    %v625 = vpop.f32.mrb[0].mxu0
    %v626 = vadd.f32 0.0, %v625
    %v627 = vpop.f32.mrb[0].mxu0
    %628 = vmatprep.mubr.f32.mxu0 0.0
    %629 = vmatmul.mubr.f32.gmra.mrb[0].mxu0 %v235
    %v630 = vpop.f32.mrb[0].mxu0
    %v631 = vadd.f32 0.0, %v630
    %v632 = vpop.f32.mrb[0].mxu0
    %633 = vmatprep.mubr.f32.mxu0 0.0
    %634 = vmatmul.mubr.f32.gmra.mrb[0].mxu0 %v236
    %v635 = vpop.f32.mrb[0].mxu0
    %v636 = vadd.f32 0.0, %v635
    %v637 = vpop.f32.mrb[0].mxu0
    %638 = vdwg.mxu0
    %v639 = vadd.f32 %v109, %v321
    %v640 = vadd.f32 %v110, %v326
    %v641 = vadd.f32 %v111, %v331
    %v642 = vadd.f32 %v112, %v336
    %v643 = vadd.f32 %v113, %v341
    %v644 = vadd.f32 %v114, %v346
    %v645 = vadd.f32 %v115, %v351
    %v646 = vadd.f32 %v116, %v356
    %v647 = vadd.f32 %v117, %v361
    %v648 = vadd.f32 %v118, %v366
    %v649 = vadd.f32 %v119, %v371
    %v650 = vadd.f32 %v120, %v376
    %v651 = vadd.f32 %v121, %v381
    %v652 = vadd.f32 %v122, %v386
    %v653 = vadd.f32 %v123, %v391
    %v654 = vadd.f32 %v124, %v396
    %v655 = vadd.f32 %v125, %v401
    %v656 = vadd.f32 %v126, %v406
    %v657 = vadd.f32 %v127, %v411
    %v658 = vadd.f32 %v128, %v416
    %v659 = vadd.f32 %v129, %v421
    %v660 = vadd.f32 %v130, %v426
    %v661 = vadd.f32 %v131, %v431
    %v662 = vadd.f32 %v132, %v436
    %v663 = vadd.f32 %v133, %v441
    %v664 = vadd.f32 %v134, %v446
    %v665 = vadd.f32 %v135, %v451
    %v666 = vadd.f32 %v136, %v456
    %v667 = vadd.f32 %v137, %v461
    %v668 = vadd.f32 %v138, %v466
    %v669 = vadd.f32 %v139, %v471
    %v670 = vadd.f32 %v140, %v476
    %v671 = vadd.f32 %v141, %v481
    %v672 = vadd.f32 %v142, %v486
    %v673 = vadd.f32 %v143, %v491
    %v674 = vadd.f32 %v144, %v496
    %v675 = vadd.f32 %v145, %v501
    %v676 = vadd.f32 %v146, %v506
    %v677 = vadd.f32 %v147, %v511
    %v678 = vadd.f32 %v148, %v516
    %v679 = vadd.f32 %v149, %v521
    %v680 = vadd.f32 %v150, %v526
    %v681 = vadd.f32 %v151, %v531
    %v682 = vadd.f32 %v152, %v536
    %v683 = vadd.f32 %v153, %v541
    %v684 = vadd.f32 %v154, %v546
    %v685 = vadd.f32 %v155, %v551
    %v686 = vadd.f32 %v156, %v556
    %v687 = vadd.f32 %v157, %v561
    %v688 = vadd.f32 %v158, %v566
    %v689 = vadd.f32 %v159, %v571
    %v690 = vadd.f32 %v160, %v576
    %v691 = vadd.f32 %v161, %v581
    %v692 = vadd.f32 %v162, %v586
    %v693 = vadd.f32 %v163, %v591
    %v694 = vadd.f32 %v164, %v596
    %v695 = vadd.f32 %v165, %v601
    %v696 = vadd.f32 %v166, %v606
    %v697 = vadd.f32 %v167, %v611
    %v698 = vadd.f32 %v168, %v616
    %v699 = vadd.f32 %v169, %v621
    %v700 = vadd.f32 %v170, %v626
    %v701 = vadd.f32 %v171, %v631
    %v702 = vadd.f32 %v172, %v636
    %703 = vst [vmem:[#allocation2] sm:$0xff] %v639
    %704 = vst [vmem:[#allocation2 + $0x8] sm:$0xff] %v640
    %705 = vst [vmem:[#allocation2 + $0x10] sm:$0xff] %v641
    %706 = vst [vmem:[#allocation2 + $0x18] sm:$0xff] %v642
    %707 = vst [vmem:[#allocation2 + $0x20] sm:$0xff] %v643
    %708 = vst [vmem:[#allocation2 + $0x28] sm:$0xff] %v644
    %709 = vst [vmem:[#allocation2 + $0x30] sm:$0xff] %v645
    %710 = vst [vmem:[#allocation2 + $0x38] sm:$0xff] %v646
    %711 = vst [vmem:[#allocation2 + $0x40] sm:$0xff] %v647
    %712 = vst [vmem:[#allocation2 + $0x48] sm:$0xff] %v648
    %713 = vst [vmem:[#allocation2 + $0x50] sm:$0xff] %v649
    %714 = vst [vmem:[#allocation2 + $0x58] sm:$0xff] %v650
    %715 = vst [vmem:[#allocation2 + $0x60] sm:$0xff] %v651
    %716 = vst [vmem:[#allocation2 + $0x68] sm:$0xff] %v652
    %717 = vst [vmem:[#allocation2 + $0x70] sm:$0xff] %v653
    %718 = vst [vmem:[#allocation2 + $0x78] sm:$0xff] %v654
    %719 = vst [vmem:[#allocation2 + $0x80] sm:$0xff] %v655
    %720 = vst [vmem:[#allocation2 + $0x88] sm:$0xff] %v656
    %721 = vst [vmem:[#allocation2 + $0x90] sm:$0xff] %v657
    %722 = vst [vmem:[#allocation2 + $0x98] sm:$0xff] %v658
    %723 = vst [vmem:[#allocation2 + $0xa0] sm:$0xff] %v659
    %724 = vst [vmem:[#allocation2 + $0xa8] sm:$0xff] %v660
    %725 = vst [vmem:[#allocation2 + $0xb0] sm:$0xff] %v661
    %726 = vst [vmem:[#allocation2 + $0xb8] sm:$0xff] %v662
    %727 = vst [vmem:[#allocation2 + $0xc0] sm:$0xff] %v663
    %728 = vst [vmem:[#allocation2 + $0xc8] sm:$0xff] %v664
    %729 = vst [vmem:[#allocation2 + $0xd0] sm:$0xff] %v665
    %730 = vst [vmem:[#allocation2 + $0xd8] sm:$0xff] %v666
    %731 = vst [vmem:[#allocation2 + $0xe0] sm:$0xff] %v667
    %732 = vst [vmem:[#allocation2 + $0xe8] sm:$0xff] %v668
    %733 = vst [vmem:[#allocation2 + $0xf0] sm:$0xff] %v669
    %734 = vst [vmem:[#allocation2 + $0xf8] sm:$0xff] %v670
    %735 = vst [vmem:[#allocation2 + $0x100] sm:$0xff] %v671
    %736 = vst [vmem:[#allocation2 + $0x108] sm:$0xff] %v672
    %737 = vst [vmem:[#allocation2 + $0x110] sm:$0xff] %v673
    %738 = vst [vmem:[#allocation2 + $0x118] sm:$0xff] %v674
    %739 = vst [vmem:[#allocation2 + $0x120] sm:$0xff] %v675
    %740 = vst [vmem:[#allocation2 + $0x128] sm:$0xff] %v676
    %741 = vst [vmem:[#allocation2 + $0x130] sm:$0xff] %v677
    %742 = vst [vmem:[#allocation2 + $0x138] sm:$0xff] %v678
    %743 = vst [vmem:[#allocation2 + $0x140] sm:$0xff] %v679
    %744 = vst [vmem:[#allocation2 + $0x148] sm:$0xff] %v680
    %745 = vst [vmem:[#allocation2 + $0x150] sm:$0xff] %v681
    %746 = vst [vmem:[#allocation2 + $0x158] sm:$0xff] %v682
    %747 = vst [vmem:[#allocation2 + $0x160] sm:$0xff] %v683
    %748 = vst [vmem:[#allocation2 + $0x168] sm:$0xff] %v684
    %749 = vst [vmem:[#allocation2 + $0x170] sm:$0xff] %v685
    %750 = vst [vmem:[#allocation2 + $0x178] sm:$0xff] %v686
    %751 = vst [vmem:[#allocation2 + $0x180] sm:$0xff] %v687
    %752 = vst [vmem:[#allocation2 + $0x188] sm:$0xff] %v688
    %753 = vst [vmem:[#allocation2 + $0x190] sm:$0xff] %v689
    %754 = vst [vmem:[#allocation2 + $0x198] sm:$0xff] %v690
    %755 = vst [vmem:[#allocation2 + $0x1a0] sm:$0xff] %v691
    %756 = vst [vmem:[#allocation2 + $0x1a8] sm:$0xff] %v692
    %757 = vst [vmem:[#allocation2 + $0x1b0] sm:$0xff] %v693
    %758 = vst [vmem:[#allocation2 + $0x1b8] sm:$0xff] %v694
    %759 = vst [vmem:[#allocation2 + $0x1c0] sm:$0xff] %v695
    %760 = vst [vmem:[#allocation2 + $0x1c8] sm:$0xff] %v696
    %761 = vst [vmem:[#allocation2 + $0x1d0] sm:$0xff] %v697
    %762 = vst [vmem:[#allocation2 + $0x1d8] sm:$0xff] %v698
    %763 = vst [vmem:[#allocation2 + $0x1e0] sm:$0xff] %v699
    %764 = vst [vmem:[#allocation2 + $0x1e8] sm:$0xff] %v700
    %765 = vst [vmem:[#allocation2 + $0x1f0] sm:$0xff] %v701
    %766 = vst [vmem:[#allocation2 + $0x1f8] sm:$0xff] %v702
    // Predicated region
    $region22: #{tpu_custom_call.1} parent=1 // pred_check
      %p767 = pneg %p40
    $region23: #{tpu_custom_call.1} parent=1 // pred_check_branch
      %769 = sbr.rel (%p767) target = $region25
    $region24: #{tpu_custom_call.1} parent=1 // pred_region
      %v770 = vld [vmem:[#allocation2] sm:$0xff]
      %v771 = vld [vmem:[#allocation2 + $0x8] sm:$0xff]
      %v772 = vld [vmem:[#allocation2 + $0x10] sm:$0xff]
      %v773 = vld [vmem:[#allocation2 + $0x18] sm:$0xff]
      %v774 = vld [vmem:[#allocation2 + $0x20] sm:$0xff]
      %v775 = vld [vmem:[#allocation2 + $0x28] sm:$0xff]
      %v776 = vld [vmem:[#allocation2 + $0x30] sm:$0xff]
      %v777 = vld [vmem:[#allocation2 + $0x38] sm:$0xff]
      %v778 = vld [vmem:[#allocation2 + $0x40] sm:$0xff]
      %v779 = vld [vmem:[#allocation2 + $0x48] sm:$0xff]
      %v780 = vld [vmem:[#allocation2 + $0x50] sm:$0xff]
      %v781 = vld [vmem:[#allocation2 + $0x58] sm:$0xff]
      %v782 = vld [vmem:[#allocation2 + $0x60] sm:$0xff]
      %v783 = vld [vmem:[#allocation2 + $0x68] sm:$0xff]
      %v784 = vld [vmem:[#allocation2 + $0x70] sm:$0xff]
      %v785 = vld [vmem:[#allocation2 + $0x78] sm:$0xff]
      %v786 = vld [vmem:[#allocation2 + $0x80] sm:$0xff]
      %v787 = vld [vmem:[#allocation2 + $0x88] sm:$0xff]
      %v788 = vld [vmem:[#allocation2 + $0x90] sm:$0xff]
      %v789 = vld [vmem:[#allocation2 + $0x98] sm:$0xff]
      %v790 = vld [vmem:[#allocation2 + $0xa0] sm:$0xff]
      %v791 = vld [vmem:[#allocation2 + $0xa8] sm:$0xff]
      %v792 = vld [vmem:[#allocation2 + $0xb0] sm:$0xff]
      %v793 = vld [vmem:[#allocation2 + $0xb8] sm:$0xff]
      %v794 = vld [vmem:[#allocation2 + $0xc0] sm:$0xff]
      %v795 = vld [vmem:[#allocation2 + $0xc8] sm:$0xff]
      %v796 = vld [vmem:[#allocation2 + $0xd0] sm:$0xff]
      %v797 = vld [vmem:[#allocation2 + $0xd8] sm:$0xff]
      %v798 = vld [vmem:[#allocation2 + $0xe0] sm:$0xff]
      %v799 = vld [vmem:[#allocation2 + $0xe8] sm:$0xff]
      %v800 = vld [vmem:[#allocation2 + $0xf0] sm:$0xff]
      %v801 = vld [vmem:[#allocation2 + $0xf8] sm:$0xff]
      %v802 = vld [vmem:[#allocation2 + $0x100] sm:$0xff]
      %v803 = vld [vmem:[#allocation2 + $0x108] sm:$0xff]
      %v804 = vld [vmem:[#allocation2 + $0x110] sm:$0xff]
      %v805 = vld [vmem:[#allocation2 + $0x118] sm:$0xff]
      %v806 = vld [vmem:[#allocation2 + $0x120] sm:$0xff]
      %v807 = vld [vmem:[#allocation2 + $0x128] sm:$0xff]
      %v808 = vld [vmem:[#allocation2 + $0x130] sm:$0xff]
      %v809 = vld [vmem:[#allocation2 + $0x138] sm:$0xff]
      %v810 = vld [vmem:[#allocation2 + $0x140] sm:$0xff]
      %v811 = vld [vmem:[#allocation2 + $0x148] sm:$0xff]
      %v812 = vld [vmem:[#allocation2 + $0x150] sm:$0xff]
      %v813 = vld [vmem:[#allocation2 + $0x158] sm:$0xff]
      %v814 = vld [vmem:[#allocation2 + $0x160] sm:$0xff]
      %v815 = vld [vmem:[#allocation2 + $0x168] sm:$0xff]
      %v816 = vld [vmem:[#allocation2 + $0x170] sm:$0xff]
      %v817 = vld [vmem:[#allocation2 + $0x178] sm:$0xff]
      %v818 = vld [vmem:[#allocation2 + $0x180] sm:$0xff]
      %v819 = vld [vmem:[#allocation2 + $0x188] sm:$0xff]
      %v820 = vld [vmem:[#allocation2 + $0x190] sm:$0xff]
      %v821 = vld [vmem:[#allocation2 + $0x198] sm:$0xff]
      %v822 = vld [vmem:[#allocation2 + $0x1a0] sm:$0xff]
      %v823 = vld [vmem:[#allocation2 + $0x1a8] sm:$0xff]
      %v824 = vld [vmem:[#allocation2 + $0x1b0] sm:$0xff]
      %v825 = vld [vmem:[#allocation2 + $0x1b8] sm:$0xff]
      %v826 = vld [vmem:[#allocation2 + $0x1c0] sm:$0xff]
      %v827 = vld [vmem:[#allocation2 + $0x1c8] sm:$0xff]
      %v828 = vld [vmem:[#allocation2 + $0x1d0] sm:$0xff]
      %v829 = vld [vmem:[#allocation2 + $0x1d8] sm:$0xff]
      %v830 = vld [vmem:[#allocation2 + $0x1e0] sm:$0xff]
      %v831 = vld [vmem:[#allocation2 + $0x1e8] sm:$0xff]
      %v832 = vld [vmem:[#allocation2 + $0x1f0] sm:$0xff]
      %v833 = vld [vmem:[#allocation2 + $0x1f8] sm:$0xff]
      %834 = vst [vmem:[#allocation8] sm:$0xff] %v770
      %835 = vst [vmem:[#allocation8 + $0x8] sm:$0xff] %v771
      %836 = vst [vmem:[#allocation8 + $0x10] sm:$0xff] %v772
      %837 = vst [vmem:[#allocation8 + $0x18] sm:$0xff] %v773
      %838 = vst [vmem:[#allocation8 + $0x20] sm:$0xff] %v774
      %839 = vst [vmem:[#allocation8 + $0x28] sm:$0xff] %v775
      %840 = vst [vmem:[#allocation8 + $0x30] sm:$0xff] %v776
      %841 = vst [vmem:[#allocation8 + $0x38] sm:$0xff] %v777
      %842 = vst [vmem:[#allocation8 + $0x40] sm:$0xff] %v778
      %843 = vst [vmem:[#allocation8 + $0x48] sm:$0xff] %v779
      %844 = vst [vmem:[#allocation8 + $0x50] sm:$0xff] %v780
      %845 = vst [vmem:[#allocation8 + $0x58] sm:$0xff] %v781
      %846 = vst [vmem:[#allocation8 + $0x60] sm:$0xff] %v782
      %847 = vst [vmem:[#allocation8 + $0x68] sm:$0xff] %v783
      %848 = vst [vmem:[#allocation8 + $0x70] sm:$0xff] %v784
      %849 = vst [vmem:[#allocation8 + $0x78] sm:$0xff] %v785
      %850 = vst [vmem:[#allocation8 + $0x80] sm:$0xff] %v786
      %851 = vst [vmem:[#allocation8 + $0x88] sm:$0xff] %v787
      %852 = vst [vmem:[#allocation8 + $0x90] sm:$0xff] %v788
      %853 = vst [vmem:[#allocation8 + $0x98] sm:$0xff] %v789
      %854 = vst [vmem:[#allocation8 + $0xa0] sm:$0xff] %v790
      %855 = vst [vmem:[#allocation8 + $0xa8] sm:$0xff] %v791
      %856 = vst [vmem:[#allocation8 + $0xb0] sm:$0xff] %v792
      %857 = vst [vmem:[#allocation8 + $0xb8] sm:$0xff] %v793
      %858 = vst [vmem:[#allocation8 + $0xc0] sm:$0xff] %v794
      %859 = vst [vmem:[#allocation8 + $0xc8] sm:$0xff] %v795
      %860 = vst [vmem:[#allocation8 + $0xd0] sm:$0xff] %v796
      %861 = vst [vmem:[#allocation8 + $0xd8] sm:$0xff] %v797
      %862 = vst [vmem:[#allocation8 + $0xe0] sm:$0xff] %v798
      %863 = vst [vmem:[#allocation8 + $0xe8] sm:$0xff] %v799
      %864 = vst [vmem:[#allocation8 + $0xf0] sm:$0xff] %v800
      %865 = vst [vmem:[#allocation8 + $0xf8] sm:$0xff] %v801
      %866 = vst [vmem:[#allocation8 + $0x100] sm:$0xff] %v802
      %867 = vst [vmem:[#allocation8 + $0x108] sm:$0xff] %v803
      %868 = vst [vmem:[#allocation8 + $0x110] sm:$0xff] %v804
      %869 = vst [vmem:[#allocation8 + $0x118] sm:$0xff] %v805
      %870 = vst [vmem:[#allocation8 + $0x120] sm:$0xff] %v806
      %871 = vst [vmem:[#allocation8 + $0x128] sm:$0xff] %v807
      %872 = vst [vmem:[#allocation8 + $0x130] sm:$0xff] %v808
      %873 = vst [vmem:[#allocation8 + $0x138] sm:$0xff] %v809
      %874 = vst [vmem:[#allocation8 + $0x140] sm:$0xff] %v810
      %875 = vst [vmem:[#allocation8 + $0x148] sm:$0xff] %v811
      %876 = vst [vmem:[#allocation8 + $0x150] sm:$0xff] %v812
      %877 = vst [vmem:[#allocation8 + $0x158] sm:$0xff] %v813
      %878 = vst [vmem:[#allocation8 + $0x160] sm:$0xff] %v814
      %879 = vst [vmem:[#allocation8 + $0x168] sm:$0xff] %v815
      %880 = vst [vmem:[#allocation8 + $0x170] sm:$0xff] %v816
      %881 = vst [vmem:[#allocation8 + $0x178] sm:$0xff] %v817
      %882 = vst [vmem:[#allocation8 + $0x180] sm:$0xff] %v818
      %883 = vst [vmem:[#allocation8 + $0x188] sm:$0xff] %v819
      %884 = vst [vmem:[#allocation8 + $0x190] sm:$0xff] %v820
      %885 = vst [vmem:[#allocation8 + $0x198] sm:$0xff] %v821
      %886 = vst [vmem:[#allocation8 + $0x1a0] sm:$0xff] %v822
      %887 = vst [vmem:[#allocation8 + $0x1a8] sm:$0xff] %v823
      %888 = vst [vmem:[#allocation8 + $0x1b0] sm:$0xff] %v824
      %889 = vst [vmem:[#allocation8 + $0x1b8] sm:$0xff] %v825
      %890 = vst [vmem:[#allocation8 + $0x1c0] sm:$0xff] %v826
      %891 = vst [vmem:[#allocation8 + $0x1c8] sm:$0xff] %v827
      %892 = vst [vmem:[#allocation8 + $0x1d0] sm:$0xff] %v828
      %893 = vst [vmem:[#allocation8 + $0x1d8] sm:$0xff] %v829
      %894 = vst [vmem:[#allocation8 + $0x1e0] sm:$0xff] %v830
      %895 = vst [vmem:[#allocation8 + $0x1e8] sm:$0xff] %v831
      %896 = vst [vmem:[#allocation8 + $0x1f0] sm:$0xff] %v832
      %897 = vst [vmem:[#allocation8 + $0x1f8] sm:$0xff] %v833
    $region25: #{tpu_custom_call.1} parent=1 // pred_fallthru
      _
    // Predicated region
    $region26: #{tpu_custom_call.1} parent=1 // pred_check
      _
    $region27: #{tpu_custom_call.1} parent=1 // pred_check_branch
      %899 = sbr.rel (0) target = $region29
    $region28: #{tpu_custom_call.1} parent=1 // pred_region
      %s901 = ssub.s32 8192, 8192
      %902 = vsyncadd [#allocation5], %s901
      %s903 = sshll.u32 [#allocation8], 4
      %s904 = int_to_ptr.vmem [resolvable:$true] %s903
      %909 = dma.vmem_to_hbm [thread:$0]  %s904, 8192, %s2, [#allocation5], 128, 128, 8
    $region29: #{tpu_custom_call.1} parent=1 // pred_fallthru
      _
    // Predicated region
    $region30: #{tpu_custom_call.1} parent=1 // pred_check
      _
    $region31: #{tpu_custom_call.1} parent=1 // pred_check_branch
      %911 = sbr.rel (0) target = $region33
    $region32: #{tpu_custom_call.1} parent=1 // pred_region
      %912 = dma.done [#allocation5], 8192
    $region33: #{tpu_custom_call.1} parent=1 // pred_fallthru
      _
    %913 = vsyncpa [#allocation4], 1
    %914 = vsyncpa [#allocation7], 1
    %915 = vsyncpa [#allocation5], 1

</llo_original>
